<compile_context>
chip_gen: v6e
topology: v6e:2x2x1
jax: 0.10.0
libtpu: 0.0.40
codegen_flags: <defaults>
</compile_context>

<pallas_src>
import functools

import jax
import jax.numpy as jnp
from jax import lax
from jax.experimental import pallas as pl
from jax.experimental.pallas import tpu as pltpu


# ---------------------------------------------------------------------------
# Final-activation table (matches FunctionModel.__init__ choices)
# ---------------------------------------------------------------------------
def _final_activation(name):
    if name == "sigmoid":
        return jax.nn.sigmoid
    if name == "tanh":
        return jnp.tanh
    if name == "gcdf":
        # GaussianCDFActivation.forward is literally (1 + erf(x)) / 2 in the PyTorch
        # source (NOT the standard-normal CDF (1 + erf(x/sqrt(2)))/2).
        return lambda h: (1.0 + lax.erf(h)) * 0.5
    if name == "relu":
        return lambda h: jnp.maximum(h, 0.0)
    if name == "softplus":
        return jax.nn.softplus
    # 'linear' (default) -> identity
    return lambda h: h


def _round_up(n, m):
    return ((n + m - 1) // m) * m


def _pad2d(a, rows, cols):
    return jnp.pad(a, ((0, rows - a.shape[0]), (0, cols - a.shape[1])))


def _num_tensorcores_per_chip():
    """v7x has 2 TensorCores per chip; v5e / v6e have 1."""
    try:
        kind = jax.devices()[0].device_kind.lower()
    except Exception:  # pragma: no cover - defensive
        return 1
    return 2 if ("v7" in kind or "7x" in kind) else 1


def _default_block_m(batch):
    n_tc = _num_tensorcores_per_chip()
    if n_tc >= 2:
        # Even split across TensorCores, 128-row aligned, so each TC gets one block.
        bm = _round_up(-(-batch // n_tc), 128)
    else:
        # Single TC: one grid step (no per-step overhead / repeated weight prologue).
        bm = min(_round_up(batch, 8), 1024)
    return max(8, bm)


# ---------------------------------------------------------------------------
# One-time parameter preparation (hoisted out of the per-call forward).
# ---------------------------------------------------------------------------
def prepare_params(weights, biases, matmul_dtype="float32"):
    """weights[i]: (in_i, out_i) [already transposed from PyTorch (out,in)];
    biases[i]: (out_i,) or (1, out_i).

    Pads *hidden* feature dims to multiples of 128 (lane-dense, zero-exact),
    leaves the network input and final output dims unpadded, casts weights to
    the matmul dtype and biases to f32. Returns a flat tuple
    (w0, b0, w1, b1, ...) ready to be handed to function_model_forward."""
    dot_dtype = {"float32": jnp.float32, "bfloat16": jnp.bfloat16}[matmul_dtype]
    n = len(weights)
    dims = [weights[0].shape[0]] + [w.shape[1] for w in weights]
    pdims = list(dims)
    for i in range(1, n):  # pad hidden dims only (not dims[0]=D_in, not dims[n]=D_out)
        pdims[i] = _round_up(dims[i], 128)

    flat = []
    for i, (w, b) in enumerate(zip(weights, biases)):
        b2 = jnp.reshape(jnp.asarray(b, jnp.float32), (1, -1))
        w_p = _pad2d(jnp.asarray(w, jnp.float32), pdims[i], pdims[i + 1]).astype(dot_dtype)
        b_p = _pad2d(b2, 1, pdims[i + 1])  # stays f32
        flat.append(w_p)
        flat.append(b_p)
    return tuple(flat)


# ---------------------------------------------------------------------------
# Pallas kernel: whole MLP forward for one batch tile.
# refs = (x_ref, w0, b0, w1, b1, ..., wN-1, bN-1, o_ref)
# ---------------------------------------------------------------------------
def _make_mlp_kernel(n_linear, activation, dot_dtype):
    act_fn = _final_activation(activation)

    def kernel(*refs):
        x_ref = refs[0]
        o_ref = refs[-1]
        # f32 working activations (VPU/EUP fast path on every generation).
        h = x_ref[...].astype(jnp.float32)
        for i in range(n_linear):
            w = refs[1 + 2 * i][...]           # already in dot_dtype (prepared once)
            b = refs[2 + 2 * i][...]           # f32
            # MXU matmul with f32 accumulation + f32 bias.
            h = jnp.dot(h.astype(dot_dtype), w,
                        preferred_element_type=jnp.float32) + b
            if i < n_linear - 1:
                h = jnp.tanh(h)                # hidden-layer Tanh in f32 (EUP)
        o_ref[...] = act_fn(h).astype(o_ref.dtype)

    return kernel


# ---------------------------------------------------------------------------
# Jitted forward: builds BlockSpecs / grid and calls pallas_call.
# ---------------------------------------------------------------------------
@functools.partial(jax.jit, static_argnames=("activation", "block_m"))
def _forward_impl(x, params, *, activation, block_m):
    B, d_in = x.shape
    weights = params[0::2]
    biases = params[1::2]
    n_linear = len(weights)
    d_out = weights[-1].shape[1]
    dot_dtype = weights[0].dtype

    bm = max(8, min(block_m, _round_up(B, 8)))
    grid = (pl.cdiv(B, bm),)

    # x block: last dim == full array dim (no D_in padding needed).
    in_specs = [pl.BlockSpec((bm, d_in), lambda i: (i, 0))]

    weight_bytes = sum(w.size * w.dtype.itemsize + b.size * 4
                       for w, b in zip(weights, biases))
    # Grid-invariant weight/bias specs are double-buffered by default; once the
    # parameters are big enough for that to matter (esp. v7x: 64 MiB VMEM/TC),
    # drop to a single buffer.
    single_buffer = weight_bytes > (4 << 20)
    for w, b in zip(weights, biases):
        if single_buffer:
            in_specs.append(pl.BlockSpec(w.shape, lambda i: (0, 0),
                                         pipeline_mode=pl.Buffered(1)))
            in_specs.append(pl.BlockSpec(b.shape, lambda i: (0, 0),
                                         pipeline_mode=pl.Buffered(1)))
        else:
            in_specs.append(pl.BlockSpec(w.shape, lambda i: (0, 0)))
            in_specs.append(pl.BlockSpec(b.shape, lambda i: (0, 0)))

    # Output is unpadded: last block dim == full array dim (masked stores on a
    # tiny 8-wide output are noise; dropping the padded writeback + slice is not).
    out_spec = pl.BlockSpec((bm, d_out), lambda i: (i, 0))

    kernel = _make_mlp_kernel(n_linear, activation, dot_dtype)

    # Advisory cost hint so XLA schedules neighbors well around the custom call.
    flops = 2 * B * sum(w.shape[0] * w.shape[1] for w in weights)
    transcendentals = B * (sum(w.shape[1] for w in weights[:-1]) + d_out)
    bytes_accessed = int(x.size * x.dtype.itemsize + weight_bytes
                         + B * d_out * x.dtype.itemsize)

    # VMEM budget from actual buffer sizes (+ headroom), instead of a flat 32 MiB.
    buf_mult = 1 if single_buffer else 2
    max_feat = max([d_in] + [w.shape[1] for w in weights])
    vmem_est = (2 * bm * d_in * x.dtype.itemsize        # double-buffered x blocks
                + buf_mult * weight_bytes               # resident weights/biases
                + 2 * bm * d_out * x.dtype.itemsize     # double-buffered out blocks
                + 4 * bm * max_feat * 4)                # working activations
    vmem_limit = int(min(64 << 20, max(8 << 20, 2 * vmem_est)))

    out = pl.pallas_call(
        kernel,
        out_shape=jax.ShapeDtypeStruct((B, d_out), x.dtype),
        grid_spec=pltpu.PrefetchScalarGridSpec(
            num_scalar_prefetch=0,
            grid=grid,
            in_specs=in_specs,
            out_specs=out_spec,
        ),
        compiler_params=pltpu.CompilerParams(
            dimension_semantics=("parallel",),   # batch blocks shard across v7x's 2 TCs
            vmem_limit_bytes=vmem_limit,
        ),
        cost_estimate=pl.CostEstimate(
            flops=flops, transcendentals=transcendentals,
            bytes_accessed=bytes_accessed),
    )(x, *params)
    return out


def function_model_forward(x, prepared_params, *, activation="linear", block_m=None):
    """x: (B, D_in) f32; prepared_params: output of prepare_params()."""
    if block_m is None:
        block_m = _default_block_m(x.shape[0])
    return _forward_impl(x, prepared_params, activation=activation, block_m=block_m)


# ---------------------------------------------------------------------------
# Deterministic parameter init (xavier_normal_, as in initialize_weights)
# ---------------------------------------------------------------------------
def init_params(layer_sizes, key):
    weights, biases = [], []
    for i in range(len(layer_sizes) - 1):
        fan_in, fan_out = layer_sizes[i], layer_sizes[i + 1]
        key, wk = jax.random.split(key)
        std = (2.0 / (fan_in + fan_out)) ** 0.5  # xavier normal
        # stored directly in (in, out) layout for x @ W
        w = std * jax.random.normal(wk, (fan_in, fan_out), dtype=jnp.float32)
        b = jnp.zeros((1, fan_out), dtype=jnp.float32)
        weights.append(w)
        biases.append(b)
    return weights, biases


# ---------------------------------------------------------------------------
# Pure-JAX reference (mirrors the PyTorch forward; dot_dtype matches kernel mode)
# ---------------------------------------------------------------------------
def reference_forward(x, weights, biases, activation, dot_dtype=jnp.float32):
    h = x.astype(jnp.float32)
    n = len(weights)
    for i, (w, b) in enumerate(zip(weights, biases)):
        h = jnp.dot(h.astype(dot_dtype), w.astype(dot_dtype),
                    preferred_element_type=jnp.float32) + b.reshape(1, -1)
        if i < n - 1:
            h = jnp.tanh(h)
    return _final_activation(activation)(h)


if __name__ == "__main__":
    key = jax.random.PRNGKey(0)

    # FunctionModel(layer_sizes=[32, 64, 64, 8], activation='gcdf')
    layer_sizes = [32, 64, 64, 8]
    activation = "gcdf"
    batch = 256  # single grid step on v5e/v6e; two 128-row blocks across v7x's 2 TCs

    key, xk = jax.random.split(key)
    x = jax.random.normal(xk, (batch, layer_sizes[0]), dtype=jnp.float32)
    weights, biases = init_params(layer_sizes, key)

    # Default path: full f32 matmuls -> exact parity with the f32 PyTorch model.
    params_f32 = prepare_params(weights, biases, matmul_dtype="float32")
    out_f32 = function_model_forward(x, params_f32, activation=activation)
    out_f32 = jax.block_until_ready(out_f32)

    # Opt-in bf16 path (for much larger hidden widths); checked vs a bf16 reference.
    params_bf16 = prepare_params(weights, biases, matmul_dtype="bfloat16")
    out_bf16 = function_model_forward(x, params_bf16, activation=activation)
    out_bf16 = jax.block_until_ready(out_bf16)

    ref_f32 = reference_forward(x, weights, biases, activation, dot_dtype=jnp.float32)
    ref_bf16 = reference_forward(x, weights, biases, activation, dot_dtype=jnp.bfloat16)

    assert out_f32.shape == (batch, layer_sizes[-1])
    assert out_bf16.shape == (batch, layer_sizes[-1])
    assert jnp.allclose(out_f32, ref_f32, atol=1e-4, rtol=1e-4), "f32 kernel mismatch"
    assert jnp.allclose(out_bf16, ref_bf16, atol=2e-3, rtol=2e-3), "bf16 kernel mismatch"

    print("KERNEL_OK")
</pallas_src>

<mosaic_0001>
module attributes {stable_mosaic.version = 11 : i64} {
  func.func @kernel(%arg0: i32, %arg1: memref<256x32xf32, #tpu.memory_space<vmem>>, %arg2: memref<32x128xf32, #tpu.memory_space<vmem>>, %arg3: memref<1x128xf32, #tpu.memory_space<vmem>>, %arg4: memref<128x128xf32, #tpu.memory_space<vmem>>, %arg5: memref<1x128xf32, #tpu.memory_space<vmem>>, %arg6: memref<128x8xf32, #tpu.memory_space<vmem>>, %arg7: memref<1x8xf32, #tpu.memory_space<vmem>>, %arg8: memref<256x8xf32, #tpu.memory_space<vmem>>) attributes {dimension_semantics = [#tpu.dimension_semantics<parallel>], iteration_bounds = array<i64: 1>, scalar_prefetch = 0 : i64, scratch_operands = 0 : i64, tpu.core_type = #tpu.core_type<tc>, window_params = [{transform_indices = @transform_0, window_bounds = array<i64: 256, 32>}, {pipeline_mode = #tpu.pipeline_mode<synchronous>, transform_indices = @transform_1, window_bounds = array<i64: 32, 128>}, {pipeline_mode = #tpu.pipeline_mode<synchronous>, transform_indices = @transform_2, window_bounds = array<i64: 1, 128>}, {pipeline_mode = #tpu.pipeline_mode<synchronous>, transform_indices = @transform_3, window_bounds = array<i64: 128, 128>}, {pipeline_mode = #tpu.pipeline_mode<synchronous>, transform_indices = @transform_4, window_bounds = array<i64: 1, 128>}, {pipeline_mode = #tpu.pipeline_mode<synchronous>, transform_indices = @transform_5, window_bounds = array<i64: 128, 8>}, {pipeline_mode = #tpu.pipeline_mode<synchronous>, transform_indices = @transform_6, window_bounds = array<i64: 1, 8>}, {transform_indices = @transform_7, window_bounds = array<i64: 256, 8>}]} {
    %c0 = arith.constant 0 : index
    %c0_0 = arith.constant 0 : index
    %0 = vector.load %arg1[%c0, %c0_0] : memref<256x32xf32, #tpu.memory_space<vmem>>, vector<256x32xf32>
    %c0_1 = arith.constant 0 : index
    %c0_2 = arith.constant 0 : index
    %1 = vector.load %arg2[%c0_1, %c0_2] : memref<32x128xf32, #tpu.memory_space<vmem>>, vector<32x128xf32>
    %c0_3 = arith.constant 0 : index
    %c0_4 = arith.constant 0 : index
    %2 = vector.load %arg3[%c0_3, %c0_4] : memref<1x128xf32, #tpu.memory_space<vmem>>, vector<1x128xf32>
    %cst = arith.constant dense<0.000000e+00> : vector<256x128xf32>
    %3 = tpu.matmul %0, %1, %cst {dimension_numbers = #tpu.dot_dimension_numbers<[1], [0], [0], [1], [0, 0, 1, 1], [], []>} : vector<256x32xf32>, vector<32x128xf32>, vector<256x128xf32> -> vector<256x128xf32>
    %4 = vector.broadcast %2 : vector<1x128xf32> to vector<256x128xf32>
    %5 = arith.addf %3, %4 : vector<256x128xf32>
    %6 = math.tanh %5 : vector<256x128xf32>
    %c0_5 = arith.constant 0 : index
    %c0_6 = arith.constant 0 : index
    %7 = vector.load %arg4[%c0_5, %c0_6] : memref<128x128xf32, #tpu.memory_space<vmem>>, vector<128x128xf32>
    %c0_7 = arith.constant 0 : index
    %c0_8 = arith.constant 0 : index
    %8 = vector.load %arg5[%c0_7, %c0_8] : memref<1x128xf32, #tpu.memory_space<vmem>>, vector<1x128xf32>
    %cst_9 = arith.constant dense<0.000000e+00> : vector<256x128xf32>
    %9 = tpu.matmul %6, %7, %cst_9 {dimension_numbers = #tpu.dot_dimension_numbers<[1], [0], [0], [1], [0, 0, 1, 1], [], []>} : vector<256x128xf32>, vector<128x128xf32>, vector<256x128xf32> -> vector<256x128xf32>
    %10 = vector.broadcast %8 : vector<1x128xf32> to vector<256x128xf32>
    %11 = arith.addf %9, %10 : vector<256x128xf32>
    %12 = math.tanh %11 : vector<256x128xf32>
    %c0_10 = arith.constant 0 : index
    %c0_11 = arith.constant 0 : index
    %13 = vector.load %arg6[%c0_10, %c0_11] : memref<128x8xf32, #tpu.memory_space<vmem>>, vector<128x8xf32>
    %c0_12 = arith.constant 0 : index
    %c0_13 = arith.constant 0 : index
    %14 = vector.load %arg7[%c0_12, %c0_13] : memref<1x8xf32, #tpu.memory_space<vmem>>, vector<1x8xf32>
    %cst_14 = arith.constant dense<0.000000e+00> : vector<256x8xf32>
    %15 = tpu.matmul %12, %13, %cst_14 {dimension_numbers = #tpu.dot_dimension_numbers<[1], [0], [0], [1], [0, 0, 1, 1], [], []>} : vector<256x128xf32>, vector<128x8xf32>, vector<256x8xf32> -> vector<256x8xf32>
    %16 = vector.broadcast %14 : vector<1x8xf32> to vector<256x8xf32>
    %17 = arith.addf %15, %16 : vector<256x8xf32>
    %18 = math.erf %17 : vector<256x8xf32>
    %cst_15 = arith.constant 1.000000e+00 : f32
    %19 = vector.broadcast %cst_15 : f32 to vector<256x8xf32>
    %20 = arith.addf %19, %18 : vector<256x8xf32>
    %cst_16 = arith.constant 5.000000e-01 : f32
    %21 = vector.broadcast %cst_16 : f32 to vector<256x8xf32>
    %22 = arith.mulf %20, %21 : vector<256x8xf32>
    %c0_17 = arith.constant 0 : index
    %c0_18 = arith.constant 0 : index
    %23 = vector.load %arg8[%c0_17, %c0_18] : memref<256x8xf32, #tpu.memory_space<vmem>>, vector<256x8xf32>
    tpu.vector_store %arg8[%c0_17, %c0_18], %22 {strides = array<i32>} : memref<256x8xf32, #tpu.memory_space<vmem>>, vector<256x8xf32>,
    return
  }
  func.func @transform_0(%arg0: i32) -> (i32, i32) {
    %c0_i32 = arith.constant 0 : i32
    %c0_i32_0 = arith.constant 0 : i32
    return %arg0, %c0_i32 : i32, i32
  }
  func.func @transform_1(%arg0: i32) -> (i32, i32) {
    %c0_i32 = arith.constant 0 : i32
    %c0_i32_0 = arith.constant 0 : i32
    %c0_i32_1 = arith.constant 0 : i32
    return %c0_i32, %c0_i32_0 : i32, i32
  }
  func.func @transform_2(%arg0: i32) -> (i32, i32) {
    %c0_i32 = arith.constant 0 : i32
    %c0_i32_0 = arith.constant 0 : i32
    %c0_i32_1 = arith.constant 0 : i32
    return %c0_i32, %c0_i32_0 : i32, i32
  }
  func.func @transform_3(%arg0: i32) -> (i32, i32) {
    %c0_i32 = arith.constant 0 : i32
    %c0_i32_0 = arith.constant 0 : i32
    %c0_i32_1 = arith.constant 0 : i32
    return %c0_i32, %c0_i32_0 : i32, i32
  }
  func.func @transform_4(%arg0: i32) -> (i32, i32) {
    %c0_i32 = arith.constant 0 : i32
    %c0_i32_0 = arith.constant 0 : i32
    %c0_i32_1 = arith.constant 0 : i32
    return %c0_i32, %c0_i32_0 : i32, i32
  }
  func.func @transform_5(%arg0: i32) -> (i32, i32) {
    %c0_i32 = arith.constant 0 : i32
    %c0_i32_0 = arith.constant 0 : i32
    %c0_i32_1 = arith.constant 0 : i32
    return %c0_i32, %c0_i32_0 : i32, i32
  }
  func.func @transform_6(%arg0: i32) -> (i32, i32) {
    %c0_i32 = arith.constant 0 : i32
    %c0_i32_0 = arith.constant 0 : i32
    %c0_i32_1 = arith.constant 0 : i32
    return %c0_i32, %c0_i32_0 : i32, i32
  }
  func.func @transform_7(%arg0: i32) -> (i32, i32) {
    %c0_i32 = arith.constant 0 : i32
    %c0_i32_0 = arith.constant 0 : i32
    return %arg0, %c0_i32 : i32, i32
  }
}

</mosaic_0001>

<llo_original>
// kernel: _forward_impl.1
$region0: #{_forward_impl.1}
  #allocation0 [shape = 'u32[]', space=smem, size = 0x4, offset = 0x4, fixed_abs, tag = 'smem constant byte address 0x4 - core index']
  #allocation1 [shape = 'u32[144,128]{1,0:T(1,128)}', space=vmem, size = 0x12000, scoped, tag = 'internal scratch']
  %s0 = inlined_call_operand.vmem [shape: f32[256,32], index: 0, kind: input, shape index: {}]
  %s1 = inlined_call_operand.vmem [shape: f32[32,128], index: 1, kind: input, shape index: {}]
  %s2 = inlined_call_operand.vmem [shape: f32[1,128], index: 2, kind: input, shape index: {}]
  %s3 = inlined_call_operand.vmem [shape: f32[128,128], index: 3, kind: input, shape index: {}]
  %s4 = inlined_call_operand.vmem [shape: f32[1,128], index: 4, kind: input, shape index: {}]
  %s5 = inlined_call_operand.vmem [shape: f32[128,8], index: 5, kind: input, shape index: {}]
  %s6 = inlined_call_operand.vmem [shape: f32[1,8], index: 6, kind: input, shape index: {}]
  %s7 = inlined_call_operand.vmem [shape: f32[256,8], index: 7, kind: output, shape index: {}]
  %s8 = sld [smem:[#allocation0]]
  $region38: #{_forward_impl.1} parent=0
    _
  %s10 = ssub.s32 1, %s8
  %s11 = scalar_select 0, %s10, %s8
  // Predicated region
  $region2: #{_forward_impl.1} parent=0 // pred_check
    _
  $region3: #{_forward_impl.1} parent=0 // pred_check_branch
    %13 = sbr.rel (0) target = $region5
  $region4: #{_forward_impl.1} parent=0 // pred_region
    _
  $region5: #{_forward_impl.1} parent=0 // pred_fallthru
    _
  // Predicated region
  $region6: #{_forward_impl.1} parent=0 // pred_check
    _
  $region7: #{_forward_impl.1} parent=0 // pred_check_branch
    %15 = sbr.rel (0) target = $region9
  $region8: #{_forward_impl.1} parent=0 // pred_region
    _
  $region9: #{_forward_impl.1} parent=0 // pred_fallthru
    _
  // Predicated region
  $region10: #{_forward_impl.1} parent=0 // pred_check
    _
  $region11: #{_forward_impl.1} parent=0 // pred_check_branch
    %17 = sbr.rel (0) target = $region13
  $region12: #{_forward_impl.1} parent=0 // pred_region
    _
  $region13: #{_forward_impl.1} parent=0 // pred_fallthru
    _
  // Predicated region
  $region14: #{_forward_impl.1} parent=0 // pred_check
    _
  $region15: #{_forward_impl.1} parent=0 // pred_check_branch
    %19 = sbr.rel (0) target = $region17
  $region16: #{_forward_impl.1} parent=0 // pred_region
    _
  $region17: #{_forward_impl.1} parent=0 // pred_fallthru
    _
  // Predicated region
  $region18: #{_forward_impl.1} parent=0 // pred_check
    _
  $region19: #{_forward_impl.1} parent=0 // pred_check_branch
    %21 = sbr.rel (0) target = $region21
  $region20: #{_forward_impl.1} parent=0 // pred_region
    _
  $region21: #{_forward_impl.1} parent=0 // pred_fallthru
    _
  // Predicated region
  $region22: #{_forward_impl.1} parent=0 // pred_check
    _
  $region23: #{_forward_impl.1} parent=0 // pred_check_branch
    %23 = sbr.rel (0) target = $region25
  $region24: #{_forward_impl.1} parent=0 // pred_region
    _
  $region25: #{_forward_impl.1} parent=0 // pred_fallthru
    _
  // Predicated region
  $region26: #{_forward_impl.1} parent=0 // pred_check
    _
  $region27: #{_forward_impl.1} parent=0 // pred_check_branch
    %25 = sbr.rel (0) target = $region29
  $region28: #{_forward_impl.1} parent=0 // pred_region
    _
  $region29: #{_forward_impl.1} parent=0 // pred_fallthru
    _
  %v26 = vld [vmem:[%s0] sm:$0xff]
  %v27 = vld [vmem:[%s0 + $0x8] sm:$0xff]
  %v28 = vld [vmem:[%s0 + $0x10] sm:$0xff]
  %v29 = vld [vmem:[%s0 + $0x18] sm:$0xff]
  %v30 = vld [vmem:[%s0 + $0x20] sm:$0xff]
  %v31 = vld [vmem:[%s0 + $0x28] sm:$0xff]
  %v32 = vld [vmem:[%s0 + $0x30] sm:$0xff]
  %v33 = vld [vmem:[%s0 + $0x38] sm:$0xff]
  %v34 = vld [vmem:[%s0 + $0x40] sm:$0xff]
  %v35 = vld [vmem:[%s0 + $0x48] sm:$0xff]
  %v36 = vld [vmem:[%s0 + $0x50] sm:$0xff]
  %v37 = vld [vmem:[%s0 + $0x58] sm:$0xff]
  %v38 = vld [vmem:[%s0 + $0x60] sm:$0xff]
  %v39 = vld [vmem:[%s0 + $0x68] sm:$0xff]
  %v40 = vld [vmem:[%s0 + $0x70] sm:$0xff]
  %v41 = vld [vmem:[%s0 + $0x78] sm:$0xff]
  %v42 = vld [vmem:[%s0 + $0x80] sm:$0xff]
  %v43 = vld [vmem:[%s0 + $0x88] sm:$0xff]
  %v44 = vld [vmem:[%s0 + $0x90] sm:$0xff]
  %v45 = vld [vmem:[%s0 + $0x98] sm:$0xff]
  %v46 = vld [vmem:[%s0 + $0xa0] sm:$0xff]
  %v47 = vld [vmem:[%s0 + $0xa8] sm:$0xff]
  %v48 = vld [vmem:[%s0 + $0xb0] sm:$0xff]
  %v49 = vld [vmem:[%s0 + $0xb8] sm:$0xff]
  %v50 = vld [vmem:[%s0 + $0xc0] sm:$0xff]
  %v51 = vld [vmem:[%s0 + $0xc8] sm:$0xff]
  %v52 = vld [vmem:[%s0 + $0xd0] sm:$0xff]
  %v53 = vld [vmem:[%s0 + $0xd8] sm:$0xff]
  %v54 = vld [vmem:[%s0 + $0xe0] sm:$0xff]
  %v55 = vld [vmem:[%s0 + $0xe8] sm:$0xff]
  %v56 = vld [vmem:[%s0 + $0xf0] sm:$0xff]
  %v57 = vld [vmem:[%s0 + $0xf8] sm:$0xff]
  %v58 = vld [vmem:[%s1] sm:$0xff]
  %v59 = vld [vmem:[%s1 + $0x8] sm:$0xff]
  %v60 = vld [vmem:[%s1 + $0x10] sm:$0xff]
  %v61 = vld [vmem:[%s1 + $0x18] sm:$0xff]
  %v62 = vld [vmem:[%s2] sm:$0x1]
  %v64 = vlaneseq
  %v65 = vshrl.u32 %v64, 7
  %v66 = vsub.s32 0, %v65
  %v67 = vrot.slane %v62, %v66
  %vm69 = vcmask 261120
  %v71 = vsel %vm69, %v26, 0
  %v74 = vsel %vm69, %v27, 0
  %v77 = vsel %vm69, %v28, 0
  %v80 = vsel %vm69, %v29, 0
  %v83 = vsel %vm69, %v30, 0
  %v86 = vsel %vm69, %v31, 0
  %v89 = vsel %vm69, %v32, 0
  %v92 = vsel %vm69, %v33, 0
  %v95 = vsel %vm69, %v34, 0
  %v98 = vsel %vm69, %v35, 0
  %v101 = vsel %vm69, %v36, 0
  %v104 = vsel %vm69, %v37, 0
  %v107 = vsel %vm69, %v38, 0
  %v110 = vsel %vm69, %v39, 0
  %v113 = vsel %vm69, %v40, 0
  %v116 = vsel %vm69, %v41, 0
  %v119 = vsel %vm69, %v42, 0
  %v122 = vsel %vm69, %v43, 0
  %v125 = vsel %vm69, %v44, 0
  %v128 = vsel %vm69, %v45, 0
  %v131 = vsel %vm69, %v46, 0
  %v134 = vsel %vm69, %v47, 0
  %v137 = vsel %vm69, %v48, 0
  %v140 = vsel %vm69, %v49, 0
  %v143 = vsel %vm69, %v50, 0
  %v146 = vsel %vm69, %v51, 0
  %v149 = vsel %vm69, %v52, 0
  %v152 = vsel %vm69, %v53, 0
  %v155 = vsel %vm69, %v54, 0
  %v158 = vsel %vm69, %v55, 0
  %v161 = vsel %vm69, %v56, 0
  %v164 = vsel %vm69, %v57, 0
  %166 = vmatprep.subr.mxu0 0.0
  %167 = vmatpush1.msra.mxu0 0.0
  %168 = vmatprep.subr.mxu0 0.0
  %169 = vmatpush1.msra.mxu0 0.0
  %170 = vmatprep.subr.mxu0 0.0
  %171 = vmatpush1.msra.mxu0 0.0
  %172 = vmatprep.subr.mxu0 0.0
  %173 = vmatpush1.msra.mxu0 0.0
  %174 = vmatprep.subr.mxu0 0.0
  %175 = vmatpush1.msra.mxu0 0.0
  %176 = vmatprep.subr.mxu0 0.0
  %177 = vmatpush1.msra.mxu0 0.0
  %178 = vmatprep.subr.mxu0 0.0
  %179 = vmatpush1.msra.mxu0 0.0
  %180 = vmatprep.subr.mxu0 0.0
  %181 = vmatpush1.msra.mxu0 0.0
  %182 = vmatprep.subr.mxu0 0.0
  %183 = vmatpush1.msra.mxu0 0.0
  %184 = vmatprep.subr.mxu0 0.0
  %185 = vmatpush1.msra.mxu0 0.0
  %186 = vmatprep.subr.mxu0 0.0
  %187 = vmatpush1.msra.mxu0 0.0
  %188 = vmatprep.subr.mxu0 0.0
  %189 = vmatpush1.msra.mxu0 0.0
  %190 = vmatprep.subr.mxu0 0.0
  %191 = vmatpush1.msra.mxu0 %v61
  %192 = vmatprep.subr.mxu0 0.0
  %193 = vmatpush1.msra.mxu0 %v60
  %194 = vmatprep.subr.mxu0 0.0
  %195 = vmatpush1.msra.mxu0 %v59
  %196 = vmatprep.subr.mxu0 0.0
  %197 = vmatpush1.msra.mxu0 %v58
  %198 = vmatprep.subr.mxu0 0.0
  %199 = vmatpush2.msra.mxu0 0.0
  %200 = vmatprep.subr.mxu0 0.0
  %201 = vmatpush2.msra.mxu0 0.0
  %202 = vmatprep.subr.mxu0 0.0
  %203 = vmatpush2.msra.mxu0 0.0
  %204 = vmatprep.subr.mxu0 0.0
  %205 = vmatpush2.msra.mxu0 0.0
  %206 = vmatprep.subr.mxu0 0.0
  %207 = vmatpush2.msra.mxu0 0.0
  %208 = vmatprep.subr.mxu0 0.0
  %209 = vmatpush2.msra.mxu0 0.0
  %210 = vmatprep.subr.mxu0 0.0
  %211 = vmatpush2.msra.mxu0 0.0
  %212 = vmatprep.subr.mxu0 0.0
  %213 = vmatpush2.msra.mxu0 0.0
  %214 = vmatprep.subr.mxu0 0.0
  %215 = vmatpush2.msra.mxu0 0.0
  %216 = vmatprep.subr.mxu0 0.0
  %217 = vmatpush2.msra.mxu0 0.0
  %218 = vmatprep.subr.mxu0 0.0
  %219 = vmatpush2.msra.mxu0 0.0
  %220 = vmatprep.subr.mxu0 0.0
  %221 = vmatpush2.msra.mxu0 0.0
  %222 = vmatprep.subr.mxu0 0.0
  %223 = vmatpush2.msra.mxu0 0.0
  %224 = vmatprep.subr.mxu0 0.0
  %225 = vmatpush2.msra.mxu0 0.0
  %226 = vmatprep.subr.mxu0 0.0
  %227 = vmatpush2.msra.mxu0 0.0
  %228 = vmatprep.subr.mxu0 0.0
  %229 = vmatpush2.msra.mxu0 0.0
  %230 = vmatprep.mubr.f32.mxu0 0.0
  %231 = vmatmul.mubr.f32.gmra.mxu0 %v71
  %v232 = vpop.f32.mrf.mxu0
  %v233 = vadd.f32 %v67, %v232
  %v234 = vpop.f32.mrf.mxu0
  %235 = vmatprep.mubr.f32.mxu0 0.0
  %236 = vmatmul.mubr.f32.gmra.mxu0 %v74
  %v237 = vpop.f32.mrf.mxu0
  %v238 = vadd.f32 %v67, %v237
  %v239 = vpop.f32.mrf.mxu0
  %240 = vmatprep.mubr.f32.mxu0 0.0
  %241 = vmatmul.mubr.f32.gmra.mxu0 %v77
  %v242 = vpop.f32.mrf.mxu0
  %v243 = vadd.f32 %v67, %v242
  %v244 = vpop.f32.mrf.mxu0
  %245 = vmatprep.mubr.f32.mxu0 0.0
  %246 = vmatmul.mubr.f32.gmra.mxu0 %v80
  %v247 = vpop.f32.mrf.mxu0
  %v248 = vadd.f32 %v67, %v247
  %v249 = vpop.f32.mrf.mxu0
  %250 = vmatprep.mubr.f32.mxu0 0.0
  %251 = vmatmul.mubr.f32.gmra.mxu0 %v83
  %v252 = vpop.f32.mrf.mxu0
  %v253 = vadd.f32 %v67, %v252
  %v254 = vpop.f32.mrf.mxu0
  %255 = vmatprep.mubr.f32.mxu0 0.0
  %256 = vmatmul.mubr.f32.gmra.mxu0 %v86
  %v257 = vpop.f32.mrf.mxu0
  %v258 = vadd.f32 %v67, %v257
  %v259 = vpop.f32.mrf.mxu0
  %260 = vmatprep.mubr.f32.mxu0 0.0
  %261 = vmatmul.mubr.f32.gmra.mxu0 %v89
  %v262 = vpop.f32.mrf.mxu0
  %v263 = vadd.f32 %v67, %v262
  %v264 = vpop.f32.mrf.mxu0
  %265 = vmatprep.mubr.f32.mxu0 0.0
  %266 = vmatmul.mubr.f32.gmra.mxu0 %v92
  %v267 = vpop.f32.mrf.mxu0
  %v268 = vadd.f32 %v67, %v267
  %v269 = vpop.f32.mrf.mxu0
  %270 = vmatprep.mubr.f32.mxu0 0.0
  %271 = vmatmul.mubr.f32.gmra.mxu0 %v95
  %v272 = vpop.f32.mrf.mxu0
  %v273 = vadd.f32 %v67, %v272
  %v274 = vpop.f32.mrf.mxu0
  %275 = vmatprep.mubr.f32.mxu0 0.0
  %276 = vmatmul.mubr.f32.gmra.mxu0 %v98
  %v277 = vpop.f32.mrf.mxu0
  %v278 = vadd.f32 %v67, %v277
  %v279 = vpop.f32.mrf.mxu0
  %280 = vmatprep.mubr.f32.mxu0 0.0
  %281 = vmatmul.mubr.f32.gmra.mxu0 %v101
  %v282 = vpop.f32.mrf.mxu0
  %v283 = vadd.f32 %v67, %v282
  %v284 = vpop.f32.mrf.mxu0
  %285 = vmatprep.mubr.f32.mxu0 0.0
  %286 = vmatmul.mubr.f32.gmra.mxu0 %v104
  %v287 = vpop.f32.mrf.mxu0
  %v288 = vadd.f32 %v67, %v287
  %v289 = vpop.f32.mrf.mxu0
  %290 = vmatprep.mubr.f32.mxu0 0.0
  %291 = vmatmul.mubr.f32.gmra.mxu0 %v107
  %v292 = vpop.f32.mrf.mxu0
  %v293 = vadd.f32 %v67, %v292
  %v294 = vpop.f32.mrf.mxu0
  %295 = vmatprep.mubr.f32.mxu0 0.0
  %296 = vmatmul.mubr.f32.gmra.mxu0 %v110
  %v297 = vpop.f32.mrf.mxu0
  %v298 = vadd.f32 %v67, %v297
  %v299 = vpop.f32.mrf.mxu0
  %300 = vmatprep.mubr.f32.mxu0 0.0
  %301 = vmatmul.mubr.f32.gmra.mxu0 %v113
  %v302 = vpop.f32.mrf.mxu0
  %v303 = vadd.f32 %v67, %v302
  %v304 = vpop.f32.mrf.mxu0
  %305 = vmatprep.mubr.f32.mxu0 0.0
  %306 = vmatmul.mubr.f32.gmra.mxu0 %v116
  %v307 = vpop.f32.mrf.mxu0
  %v308 = vadd.f32 %v67, %v307
  %v309 = vpop.f32.mrf.mxu0
  %310 = vmatprep.mubr.f32.mxu0 0.0
  %311 = vmatmul.mubr.f32.gmra.mxu0 %v119
  %v312 = vpop.f32.mrf.mxu0
  %v313 = vadd.f32 %v67, %v312
  %v314 = vpop.f32.mrf.mxu0
  %315 = vmatprep.mubr.f32.mxu0 0.0
  %316 = vmatmul.mubr.f32.gmra.mxu0 %v122
  %v317 = vpop.f32.mrf.mxu0
  %v318 = vadd.f32 %v67, %v317
  %v319 = vpop.f32.mrf.mxu0
  %320 = vmatprep.mubr.f32.mxu0 0.0
  %321 = vmatmul.mubr.f32.gmra.mxu0 %v125
  %v322 = vpop.f32.mrf.mxu0
  %v323 = vadd.f32 %v67, %v322
  %v324 = vpop.f32.mrf.mxu0
  %325 = vmatprep.mubr.f32.mxu0 0.0
  %326 = vmatmul.mubr.f32.gmra.mxu0 %v128
  %v327 = vpop.f32.mrf.mxu0
  %v328 = vadd.f32 %v67, %v327
  %v329 = vpop.f32.mrf.mxu0
  %330 = vmatprep.mubr.f32.mxu0 0.0
  %331 = vmatmul.mubr.f32.gmra.mxu0 %v131
  %v332 = vpop.f32.mrf.mxu0
  %v333 = vadd.f32 %v67, %v332
  %v334 = vpop.f32.mrf.mxu0
  %335 = vmatprep.mubr.f32.mxu0 0.0
  %336 = vmatmul.mubr.f32.gmra.mxu0 %v134
  %v337 = vpop.f32.mrf.mxu0
  %v338 = vadd.f32 %v67, %v337
  %v339 = vpop.f32.mrf.mxu0
  %340 = vmatprep.mubr.f32.mxu0 0.0
  %341 = vmatmul.mubr.f32.gmra.mxu0 %v137
  %v342 = vpop.f32.mrf.mxu0
  %v343 = vadd.f32 %v67, %v342
  %v344 = vpop.f32.mrf.mxu0
  %345 = vmatprep.mubr.f32.mxu0 0.0
  %346 = vmatmul.mubr.f32.gmra.mxu0 %v140
  %v347 = vpop.f32.mrf.mxu0
  %v348 = vadd.f32 %v67, %v347
  %v349 = vpop.f32.mrf.mxu0
  %350 = vmatprep.mubr.f32.mxu0 0.0
  %351 = vmatmul.mubr.f32.gmra.mxu0 %v143
  %v352 = vpop.f32.mrf.mxu0
  %v353 = vadd.f32 %v67, %v352
  %v354 = vpop.f32.mrf.mxu0
  %355 = vmatprep.mubr.f32.mxu0 0.0
  %356 = vmatmul.mubr.f32.gmra.mxu0 %v146
  %v357 = vpop.f32.mrf.mxu0
  %v358 = vadd.f32 %v67, %v357
  %v359 = vpop.f32.mrf.mxu0
  %360 = vmatprep.mubr.f32.mxu0 0.0
  %361 = vmatmul.mubr.f32.gmra.mxu0 %v149
  %v362 = vpop.f32.mrf.mxu0
  %v363 = vadd.f32 %v67, %v362
  %v364 = vpop.f32.mrf.mxu0
  %365 = vmatprep.mubr.f32.mxu0 0.0
  %366 = vmatmul.mubr.f32.gmra.mxu0 %v152
  %v367 = vpop.f32.mrf.mxu0
  %v368 = vadd.f32 %v67, %v367
  %v369 = vpop.f32.mrf.mxu0
  %370 = vmatprep.mubr.f32.mxu0 0.0
  %371 = vmatmul.mubr.f32.gmra.mxu0 %v155
  %v372 = vpop.f32.mrf.mxu0
  %v373 = vadd.f32 %v67, %v372
  %v374 = vpop.f32.mrf.mxu0
  %375 = vmatprep.mubr.f32.mxu0 0.0
  %376 = vmatmul.mubr.f32.gmra.mxu0 %v158
  %v377 = vpop.f32.mrf.mxu0
  %v378 = vadd.f32 %v67, %v377
  %v379 = vpop.f32.mrf.mxu0
  %380 = vmatprep.mubr.f32.mxu0 0.0
  %381 = vmatmul.mubr.f32.gmra.mxu0 %v161
  %v382 = vpop.f32.mrf.mxu0
  %v383 = vadd.f32 %v67, %v382
  %v384 = vpop.f32.mrf.mxu0
  %385 = vmatprep.mubr.f32.mxu0 0.0
  %386 = vmatmul.mubr.f32.gmra.mxu0 %v164
  %v387 = vpop.f32.mrf.mxu0
  %v388 = vadd.f32 %v67, %v387
  %v389 = vpop.f32.mrf.mxu0
  %390 = vdwg.mxu0
  %v391 = vtanh.pop %v233
  %v392 = vtanh.pop %v238
  %v393 = vtanh.pop %v243
  %v394 = vtanh.pop %v248
  %v395 = vtanh.pop %v253
  %v396 = vtanh.pop %v258
  %v397 = vtanh.pop %v263
  %v398 = vtanh.pop %v268
  %v399 = vtanh.pop %v273
  %v400 = vtanh.pop %v278
  %v401 = vtanh.pop %v283
  %v402 = vtanh.pop %v288
  %v403 = vtanh.pop %v293
  %v404 = vtanh.pop %v298
  %v405 = vtanh.pop %v303
  %v406 = vtanh.pop %v308
  %v407 = vtanh.pop %v313
  %v408 = vtanh.pop %v318
  %v409 = vtanh.pop %v323
  %v410 = vtanh.pop %v328
  %v411 = vtanh.pop %v333
  %v412 = vtanh.pop %v338
  %v413 = vtanh.pop %v343
  %v414 = vtanh.pop %v348
  %v415 = vtanh.pop %v353
  %v416 = vtanh.pop %v358
  %v417 = vtanh.pop %v363
  %v418 = vtanh.pop %v368
  %v419 = vtanh.pop %v373
  %v420 = vtanh.pop %v378
  %v421 = vtanh.pop %v383
  %v422 = vtanh.pop %v388
  %v423 = vld [vmem:[%s3] sm:$0xff]
  %v424 = vld [vmem:[%s3 + $0x8] sm:$0xff]
  %v425 = vld [vmem:[%s3 + $0x10] sm:$0xff]
  %v426 = vld [vmem:[%s3 + $0x18] sm:$0xff]
  %v427 = vld [vmem:[%s3 + $0x20] sm:$0xff]
  %v428 = vld [vmem:[%s3 + $0x28] sm:$0xff]
  %v429 = vld [vmem:[%s3 + $0x30] sm:$0xff]
  %v430 = vld [vmem:[%s3 + $0x38] sm:$0xff]
  %v431 = vld [vmem:[%s3 + $0x40] sm:$0xff]
  %v432 = vld [vmem:[%s3 + $0x48] sm:$0xff]
  %v433 = vld [vmem:[%s3 + $0x50] sm:$0xff]
  %v434 = vld [vmem:[%s3 + $0x58] sm:$0xff]
  %v435 = vld [vmem:[%s3 + $0x60] sm:$0xff]
  %v436 = vld [vmem:[%s3 + $0x68] sm:$0xff]
  %v437 = vld [vmem:[%s3 + $0x70] sm:$0xff]
  %v438 = vld [vmem:[%s3 + $0x78] sm:$0xff]
  %v439 = vld [vmem:[%s4] sm:$0x1]
  %v441 = vlaneseq
  %v442 = vshrl.u32 %v441, 7
  %v443 = vsub.s32 0, %v442
  %v444 = vrot.slane %v439, %v443
  %446 = vmatprep.subr.mxu0 0.0
  %447 = vmatpush1.msra.mxu0 %v438
  %448 = vmatprep.subr.mxu0 0.0
  %449 = vmatpush1.msra.mxu0 %v437
  %450 = vmatprep.subr.mxu0 0.0
  %451 = vmatpush1.msra.mxu0 %v436
  %452 = vmatprep.subr.mxu0 0.0
  %453 = vmatpush1.msra.mxu0 %v435
  %454 = vmatprep.subr.mxu0 0.0
  %455 = vmatpush1.msra.mxu0 %v434
  %456 = vmatprep.subr.mxu0 0.0
  %457 = vmatpush1.msra.mxu0 %v433
  %458 = vmatprep.subr.mxu0 0.0
  %459 = vmatpush1.msra.mxu0 %v432
  %460 = vmatprep.subr.mxu0 0.0
  %461 = vmatpush1.msra.mxu0 %v431
  %462 = vmatprep.subr.mxu0 0.0
  %463 = vmatpush1.msra.mxu0 %v430
  %464 = vmatprep.subr.mxu0 0.0
  %465 = vmatpush1.msra.mxu0 %v429
  %466 = vmatprep.subr.mxu0 0.0
  %467 = vmatpush1.msra.mxu0 %v428
  %468 = vmatprep.subr.mxu0 0.0
  %469 = vmatpush1.msra.mxu0 %v427
  %470 = vmatprep.subr.mxu0 0.0
  %471 = vmatpush1.msra.mxu0 %v426
  %472 = vmatprep.subr.mxu0 0.0
  %473 = vmatpush1.msra.mxu0 %v425
  %474 = vmatprep.subr.mxu0 0.0
  %475 = vmatpush1.msra.mxu0 %v424
  %476 = vmatprep.subr.mxu0 0.0
  %477 = vmatpush1.msra.mxu0 %v423
  %478 = vmatprep.subr.mxu0 0.0
  %479 = vmatpush2.msra.mxu0 0.0
  %480 = vmatprep.subr.mxu0 0.0
  %481 = vmatpush2.msra.mxu0 0.0
  %482 = vmatprep.subr.mxu0 0.0
  %483 = vmatpush2.msra.mxu0 0.0
  %484 = vmatprep.subr.mxu0 0.0
  %485 = vmatpush2.msra.mxu0 0.0
  %486 = vmatprep.subr.mxu0 0.0
  %487 = vmatpush2.msra.mxu0 0.0
  %488 = vmatprep.subr.mxu0 0.0
  %489 = vmatpush2.msra.mxu0 0.0
  %490 = vmatprep.subr.mxu0 0.0
  %491 = vmatpush2.msra.mxu0 0.0
  %492 = vmatprep.subr.mxu0 0.0
  %493 = vmatpush2.msra.mxu0 0.0
  %494 = vmatprep.subr.mxu0 0.0
  %495 = vmatpush2.msra.mxu0 0.0
  %496 = vmatprep.subr.mxu0 0.0
  %497 = vmatpush2.msra.mxu0 0.0
  %498 = vmatprep.subr.mxu0 0.0
  %499 = vmatpush2.msra.mxu0 0.0
  %500 = vmatprep.subr.mxu0 0.0
  %501 = vmatpush2.msra.mxu0 0.0
  %502 = vmatprep.subr.mxu0 0.0
  %503 = vmatpush2.msra.mxu0 0.0
  %504 = vmatprep.subr.mxu0 0.0
  %505 = vmatpush2.msra.mxu0 0.0
  %506 = vmatprep.subr.mxu0 0.0
  %507 = vmatpush2.msra.mxu0 0.0
  %508 = vmatprep.subr.mxu0 0.0
  %509 = vmatpush2.msra.mxu0 0.0
  %510 = vmatprep.mubr.f32.mxu0 0.0
  %511 = vmatmul.mubr.f32.gmra.mxu0 %v391
  %v512 = vpop.f32.mrf.mxu0
  %v513 = vadd.f32 %v444, %v512
  %v514 = vpop.f32.mrf.mxu0
  %515 = vmatprep.mubr.f32.mxu0 0.0
  %516 = vmatmul.mubr.f32.gmra.mxu0 %v392
  %v517 = vpop.f32.mrf.mxu0
  %v518 = vadd.f32 %v444, %v517
  %v519 = vpop.f32.mrf.mxu0
  %520 = vmatprep.mubr.f32.mxu0 0.0
  %521 = vmatmul.mubr.f32.gmra.mxu0 %v393
  %v522 = vpop.f32.mrf.mxu0
  %v523 = vadd.f32 %v444, %v522
  %v524 = vpop.f32.mrf.mxu0
  %525 = vmatprep.mubr.f32.mxu0 0.0
  %526 = vmatmul.mubr.f32.gmra.mxu0 %v394
  %v527 = vpop.f32.mrf.mxu0
  %v528 = vadd.f32 %v444, %v527
  %v529 = vpop.f32.mrf.mxu0
  %530 = vmatprep.mubr.f32.mxu0 0.0
  %531 = vmatmul.mubr.f32.gmra.mxu0 %v395
  %v532 = vpop.f32.mrf.mxu0
  %v533 = vadd.f32 %v444, %v532
  %v534 = vpop.f32.mrf.mxu0
  %535 = vmatprep.mubr.f32.mxu0 0.0
  %536 = vmatmul.mubr.f32.gmra.mxu0 %v396
  %v537 = vpop.f32.mrf.mxu0
  %v538 = vadd.f32 %v444, %v537
  %v539 = vpop.f32.mrf.mxu0
  %540 = vmatprep.mubr.f32.mxu0 0.0
  %541 = vmatmul.mubr.f32.gmra.mxu0 %v397
  %v542 = vpop.f32.mrf.mxu0
  %v543 = vadd.f32 %v444, %v542
  %v544 = vpop.f32.mrf.mxu0
  %545 = vmatprep.mubr.f32.mxu0 0.0
  %546 = vmatmul.mubr.f32.gmra.mxu0 %v398
  %v547 = vpop.f32.mrf.mxu0
  %v548 = vadd.f32 %v444, %v547
  %v549 = vpop.f32.mrf.mxu0
  %550 = vmatprep.mubr.f32.mxu0 0.0
  %551 = vmatmul.mubr.f32.gmra.mxu0 %v399
  %v552 = vpop.f32.mrf.mxu0
  %v553 = vadd.f32 %v444, %v552
  %v554 = vpop.f32.mrf.mxu0
  %555 = vmatprep.mubr.f32.mxu0 0.0
  %556 = vmatmul.mubr.f32.gmra.mxu0 %v400
  %v557 = vpop.f32.mrf.mxu0
  %v558 = vadd.f32 %v444, %v557
  %v559 = vpop.f32.mrf.mxu0
  %560 = vmatprep.mubr.f32.mxu0 0.0
  %561 = vmatmul.mubr.f32.gmra.mxu0 %v401
  %v562 = vpop.f32.mrf.mxu0
  %v563 = vadd.f32 %v444, %v562
  %v564 = vpop.f32.mrf.mxu0
  %565 = vmatprep.mubr.f32.mxu0 0.0
  %566 = vmatmul.mubr.f32.gmra.mxu0 %v402
  %v567 = vpop.f32.mrf.mxu0
  %v568 = vadd.f32 %v444, %v567
  %v569 = vpop.f32.mrf.mxu0
  %570 = vmatprep.mubr.f32.mxu0 0.0
  %571 = vmatmul.mubr.f32.gmra.mxu0 %v403
  %v572 = vpop.f32.mrf.mxu0
  %v573 = vadd.f32 %v444, %v572
  %v574 = vpop.f32.mrf.mxu0
  %575 = vmatprep.mubr.f32.mxu0 0.0
  %576 = vmatmul.mubr.f32.gmra.mxu0 %v404
  %v577 = vpop.f32.mrf.mxu0
  %v578 = vadd.f32 %v444, %v577
  %v579 = vpop.f32.mrf.mxu0
  %580 = vmatprep.mubr.f32.mxu0 0.0
  %581 = vmatmul.mubr.f32.gmra.mxu0 %v405
  %v582 = vpop.f32.mrf.mxu0
  %v583 = vadd.f32 %v444, %v582
  %v584 = vpop.f32.mrf.mxu0
  %585 = vmatprep.mubr.f32.mxu0 0.0
  %586 = vmatmul.mubr.f32.gmra.mxu0 %v406
  %v587 = vpop.f32.mrf.mxu0
  %v588 = vadd.f32 %v444, %v587
  %v589 = vpop.f32.mrf.mxu0
  %590 = vmatprep.mubr.f32.mxu0 0.0
  %591 = vmatmul.mubr.f32.gmra.mxu0 %v407
  %v592 = vpop.f32.mrf.mxu0
  %v593 = vadd.f32 %v444, %v592
  %v594 = vpop.f32.mrf.mxu0
  %595 = vmatprep.mubr.f32.mxu0 0.0
  %596 = vmatmul.mubr.f32.gmra.mxu0 %v408
  %v597 = vpop.f32.mrf.mxu0
  %v598 = vadd.f32 %v444, %v597
  %v599 = vpop.f32.mrf.mxu0
  %600 = vmatprep.mubr.f32.mxu0 0.0
  %601 = vmatmul.mubr.f32.gmra.mxu0 %v409
  %v602 = vpop.f32.mrf.mxu0
  %v603 = vadd.f32 %v444, %v602
  %v604 = vpop.f32.mrf.mxu0
  %605 = vmatprep.mubr.f32.mxu0 0.0
  %606 = vmatmul.mubr.f32.gmra.mxu0 %v410
  %v607 = vpop.f32.mrf.mxu0
  %v608 = vadd.f32 %v444, %v607
  %v609 = vpop.f32.mrf.mxu0
  %610 = vmatprep.mubr.f32.mxu0 0.0
  %611 = vmatmul.mubr.f32.gmra.mxu0 %v411
  %v612 = vpop.f32.mrf.mxu0
  %v613 = vadd.f32 %v444, %v612
  %v614 = vpop.f32.mrf.mxu0
  %615 = vmatprep.mubr.f32.mxu0 0.0
  %616 = vmatmul.mubr.f32.gmra.mxu0 %v412
  %v617 = vpop.f32.mrf.mxu0
  %v618 = vadd.f32 %v444, %v617
  %v619 = vpop.f32.mrf.mxu0
  %620 = vmatprep.mubr.f32.mxu0 0.0
  %621 = vmatmul.mubr.f32.gmra.mxu0 %v413
  %v622 = vpop.f32.mrf.mxu0
  %v623 = vadd.f32 %v444, %v622
  %v624 = vpop.f32.mrf.mxu0
  %625 = vmatprep.mubr.f32.mxu0 0.0
  %626 = vmatmul.mubr.f32.gmra.mxu0 %v414
  %v627 = vpop.f32.mrf.mxu0
  %v628 = vadd.f32 %v444, %v627
  %v629 = vpop.f32.mrf.mxu0
  %630 = vmatprep.mubr.f32.mxu0 0.0
  %631 = vmatmul.mubr.f32.gmra.mxu0 %v415
  %v632 = vpop.f32.mrf.mxu0
  %v633 = vadd.f32 %v444, %v632
  %v634 = vpop.f32.mrf.mxu0
  %635 = vmatprep.mubr.f32.mxu0 0.0
  %636 = vmatmul.mubr.f32.gmra.mxu0 %v416
  %v637 = vpop.f32.mrf.mxu0
  %v638 = vadd.f32 %v444, %v637
  %v639 = vpop.f32.mrf.mxu0
  %640 = vmatprep.mubr.f32.mxu0 0.0
  %641 = vmatmul.mubr.f32.gmra.mxu0 %v417
  %v642 = vpop.f32.mrf.mxu0
  %v643 = vadd.f32 %v444, %v642
  %v644 = vpop.f32.mrf.mxu0
  %645 = vmatprep.mubr.f32.mxu0 0.0
  %646 = vmatmul.mubr.f32.gmra.mxu0 %v418
  %v647 = vpop.f32.mrf.mxu0
  %v648 = vadd.f32 %v444, %v647
  %v649 = vpop.f32.mrf.mxu0
  %650 = vmatprep.mubr.f32.mxu0 0.0
  %651 = vmatmul.mubr.f32.gmra.mxu0 %v419
  %v652 = vpop.f32.mrf.mxu0
  %v653 = vadd.f32 %v444, %v652
  %v654 = vpop.f32.mrf.mxu0
  %655 = vmatprep.mubr.f32.mxu0 0.0
  %656 = vmatmul.mubr.f32.gmra.mxu0 %v420
  %v657 = vpop.f32.mrf.mxu0
  %v658 = vadd.f32 %v444, %v657
  %v659 = vpop.f32.mrf.mxu0
  %660 = vmatprep.mubr.f32.mxu0 0.0
  %661 = vmatmul.mubr.f32.gmra.mxu0 %v421
  %v662 = vpop.f32.mrf.mxu0
  %v663 = vadd.f32 %v444, %v662
  %v664 = vpop.f32.mrf.mxu0
  %665 = vmatprep.mubr.f32.mxu0 0.0
  %666 = vmatmul.mubr.f32.gmra.mxu0 %v422
  %v667 = vpop.f32.mrf.mxu0
  %v668 = vadd.f32 %v444, %v667
  %v669 = vpop.f32.mrf.mxu0
  %670 = vdwg.mxu0
  %v671 = vtanh.pop %v513
  %v672 = vtanh.pop %v518
  %v673 = vtanh.pop %v523
  %v674 = vtanh.pop %v528
  %v675 = vtanh.pop %v533
  %v676 = vtanh.pop %v538
  %v677 = vtanh.pop %v543
  %v678 = vtanh.pop %v548
  %v679 = vtanh.pop %v553
  %v680 = vtanh.pop %v558
  %v681 = vtanh.pop %v563
  %v682 = vtanh.pop %v568
  %v683 = vtanh.pop %v573
  %v684 = vtanh.pop %v578
  %v685 = vtanh.pop %v583
  %v686 = vtanh.pop %v588
  %v687 = vtanh.pop %v593
  %v688 = vtanh.pop %v598
  %v689 = vtanh.pop %v603
  %v690 = vtanh.pop %v608
  %v691 = vtanh.pop %v613
  %v692 = vtanh.pop %v618
  %v693 = vtanh.pop %v623
  %v694 = vtanh.pop %v628
  %v695 = vtanh.pop %v633
  %v696 = vtanh.pop %v638
  %v697 = vtanh.pop %v643
  %v698 = vtanh.pop %v648
  %v699 = vtanh.pop %v653
  %v700 = vtanh.pop %v658
  %v701 = vtanh.pop %v663
  %v702 = vtanh.pop %v668
  %v703 = vld [vmem:[%s5] sm:$0xff]
  %v704 = vld [vmem:[%s5 + $0x8] sm:$0xff]
  %v705 = vld [vmem:[%s5 + $0x10] sm:$0xff]
  %v706 = vld [vmem:[%s5 + $0x18] sm:$0xff]
  %v707 = vld [vmem:[%s5 + $0x20] sm:$0xff]
  %v708 = vld [vmem:[%s5 + $0x28] sm:$0xff]
  %v709 = vld [vmem:[%s5 + $0x30] sm:$0xff]
  %v710 = vld [vmem:[%s5 + $0x38] sm:$0xff]
  %v711 = vld [vmem:[%s5 + $0x40] sm:$0xff]
  %v712 = vld [vmem:[%s5 + $0x48] sm:$0xff]
  %v713 = vld [vmem:[%s5 + $0x50] sm:$0xff]
  %v714 = vld [vmem:[%s5 + $0x58] sm:$0xff]
  %v715 = vld [vmem:[%s5 + $0x60] sm:$0xff]
  %v716 = vld [vmem:[%s5 + $0x68] sm:$0xff]
  %v717 = vld [vmem:[%s5 + $0x70] sm:$0xff]
  %v718 = vld [vmem:[%s5 + $0x78] sm:$0xff]
  %v719 = vld [vmem:[%s6] sm:$0x1]
  %v721 = vlaneseq
  %v722 = vshrl.u32 %v721, 7
  %v723 = vsub.s32 0, %v722
  %v724 = vrot.slane %v719, %v723
  %726 = vmatprep.subr.mxu0 0.0
  %727 = vmatpush1.msra.mxu0 %v718
  %728 = vmatprep.subr.mxu0 0.0
  %729 = vmatpush1.msra.mxu0 %v717
  %730 = vmatprep.subr.mxu0 0.0
  %731 = vmatpush1.msra.mxu0 %v716
  %732 = vmatprep.subr.mxu0 0.0
  %733 = vmatpush1.msra.mxu0 %v715
  %734 = vmatprep.subr.mxu0 0.0
  %735 = vmatpush1.msra.mxu0 %v714
  %736 = vmatprep.subr.mxu0 0.0
  %737 = vmatpush1.msra.mxu0 %v713
  %738 = vmatprep.subr.mxu0 0.0
  %739 = vmatpush1.msra.mxu0 %v712
  %740 = vmatprep.subr.mxu0 0.0
  %741 = vmatpush1.msra.mxu0 %v711
  %742 = vmatprep.subr.mxu0 0.0
  %743 = vmatpush1.msra.mxu0 %v710
  %744 = vmatprep.subr.mxu0 0.0
  %745 = vmatpush1.msra.mxu0 %v709
  %746 = vmatprep.subr.mxu0 0.0
  %747 = vmatpush1.msra.mxu0 %v708
  %748 = vmatprep.subr.mxu0 0.0
  %749 = vmatpush1.msra.mxu0 %v707
  %750 = vmatprep.subr.mxu0 0.0
  %751 = vmatpush1.msra.mxu0 %v706
  %752 = vmatprep.subr.mxu0 0.0
  %753 = vmatpush1.msra.mxu0 %v705
  %754 = vmatprep.subr.mxu0 0.0
  %755 = vmatpush1.msra.mxu0 %v704
  %756 = vmatprep.subr.mxu0 0.0
  %757 = vmatpush1.msra.mxu0 %v703
  %758 = vmatprep.subr.mxu0 0.0
  %759 = vmatpush2.msra.mxu0 0.0
  %760 = vmatprep.subr.mxu0 0.0
  %761 = vmatpush2.msra.mxu0 0.0
  %762 = vmatprep.subr.mxu0 0.0
  %763 = vmatpush2.msra.mxu0 0.0
  %764 = vmatprep.subr.mxu0 0.0
  %765 = vmatpush2.msra.mxu0 0.0
  %766 = vmatprep.subr.mxu0 0.0
  %767 = vmatpush2.msra.mxu0 0.0
  %768 = vmatprep.subr.mxu0 0.0
  %769 = vmatpush2.msra.mxu0 0.0
  %770 = vmatprep.subr.mxu0 0.0
  %771 = vmatpush2.msra.mxu0 0.0
  %772 = vmatprep.subr.mxu0 0.0
  %773 = vmatpush2.msra.mxu0 0.0
  %774 = vmatprep.subr.mxu0 0.0
  %775 = vmatpush2.msra.mxu0 0.0
  %776 = vmatprep.subr.mxu0 0.0
  %777 = vmatpush2.msra.mxu0 0.0
  %778 = vmatprep.subr.mxu0 0.0
  %779 = vmatpush2.msra.mxu0 0.0
  %780 = vmatprep.subr.mxu0 0.0
  %781 = vmatpush2.msra.mxu0 0.0
  %782 = vmatprep.subr.mxu0 0.0
  %783 = vmatpush2.msra.mxu0 0.0
  %784 = vmatprep.subr.mxu0 0.0
  %785 = vmatpush2.msra.mxu0 0.0
  %786 = vmatprep.subr.mxu0 0.0
  %787 = vmatpush2.msra.mxu0 0.0
  %788 = vmatprep.subr.mxu0 0.0
  %789 = vmatpush2.msra.mxu0 0.0
  %790 = vmatprep.mubr.f32.mxu0 0.0
  %791 = vmatmul.mubr.f32.gmra.mxu0 %v671
  %v792 = vpop.f32.mrf.mxu0
  %v793 = vadd.f32 %v724, %v792
  %v794 = vpop.f32.mrf.mxu0
  %795 = vmatprep.mubr.f32.mxu0 0.0
  %796 = vmatmul.mubr.f32.gmra.mxu0 %v672
  %v797 = vpop.f32.mrf.mxu0
  %v798 = vadd.f32 %v724, %v797
  %v799 = vpop.f32.mrf.mxu0
  %800 = vmatprep.mubr.f32.mxu0 0.0
  %801 = vmatmul.mubr.f32.gmra.mxu0 %v673
  %v802 = vpop.f32.mrf.mxu0
  %v803 = vadd.f32 %v724, %v802
  %v804 = vpop.f32.mrf.mxu0
  %805 = vmatprep.mubr.f32.mxu0 0.0
  %806 = vmatmul.mubr.f32.gmra.mxu0 %v674
  %v807 = vpop.f32.mrf.mxu0
  %v808 = vadd.f32 %v724, %v807
  %v809 = vpop.f32.mrf.mxu0
  %810 = vmatprep.mubr.f32.mxu0 0.0
  %811 = vmatmul.mubr.f32.gmra.mxu0 %v675
  %v812 = vpop.f32.mrf.mxu0
  %v813 = vadd.f32 %v724, %v812
  %v814 = vpop.f32.mrf.mxu0
  %815 = vmatprep.mubr.f32.mxu0 0.0
  %816 = vmatmul.mubr.f32.gmra.mxu0 %v676
  %v817 = vpop.f32.mrf.mxu0
  %v818 = vadd.f32 %v724, %v817
  %v819 = vpop.f32.mrf.mxu0
  %820 = vmatprep.mubr.f32.mxu0 0.0
  %821 = vmatmul.mubr.f32.gmra.mxu0 %v677
  %v822 = vpop.f32.mrf.mxu0
  %v823 = vadd.f32 %v724, %v822
  %v824 = vpop.f32.mrf.mxu0
  %825 = vmatprep.mubr.f32.mxu0 0.0
  %826 = vmatmul.mubr.f32.gmra.mxu0 %v678
  %v827 = vpop.f32.mrf.mxu0
  %v828 = vadd.f32 %v724, %v827
  %v829 = vpop.f32.mrf.mxu0
  %830 = vmatprep.mubr.f32.mxu0 0.0
  %831 = vmatmul.mubr.f32.gmra.mxu0 %v679
  %v832 = vpop.f32.mrf.mxu0
  %v833 = vadd.f32 %v724, %v832
  %v834 = vpop.f32.mrf.mxu0
  %835 = vmatprep.mubr.f32.mxu0 0.0
  %836 = vmatmul.mubr.f32.gmra.mxu0 %v680
  %v837 = vpop.f32.mrf.mxu0
  %v838 = vadd.f32 %v724, %v837
  %v839 = vpop.f32.mrf.mxu0
  %840 = vmatprep.mubr.f32.mxu0 0.0
  %841 = vmatmul.mubr.f32.gmra.mxu0 %v681
  %v842 = vpop.f32.mrf.mxu0
  %v843 = vadd.f32 %v724, %v842
  %v844 = vpop.f32.mrf.mxu0
  %845 = vmatprep.mubr.f32.mxu0 0.0
  %846 = vmatmul.mubr.f32.gmra.mxu0 %v682
  %v847 = vpop.f32.mrf.mxu0
  %v848 = vadd.f32 %v724, %v847
  %v849 = vpop.f32.mrf.mxu0
  %850 = vmatprep.mubr.f32.mxu0 0.0
  %851 = vmatmul.mubr.f32.gmra.mxu0 %v683
  %v852 = vpop.f32.mrf.mxu0
  %v853 = vadd.f32 %v724, %v852
  %v854 = vpop.f32.mrf.mxu0
  %855 = vmatprep.mubr.f32.mxu0 0.0
  %856 = vmatmul.mubr.f32.gmra.mxu0 %v684
  %v857 = vpop.f32.mrf.mxu0
  %v858 = vadd.f32 %v724, %v857
  %v859 = vpop.f32.mrf.mxu0
  %860 = vmatprep.mubr.f32.mxu0 0.0
  %861 = vmatmul.mubr.f32.gmra.mxu0 %v685
  %v862 = vpop.f32.mrf.mxu0
  %v863 = vadd.f32 %v724, %v862
  %v864 = vpop.f32.mrf.mxu0
  %865 = vmatprep.mubr.f32.mxu0 0.0
  %866 = vmatmul.mubr.f32.gmra.mxu0 %v686
  %v867 = vpop.f32.mrf.mxu0
  %v868 = vadd.f32 %v724, %v867
  %v869 = vpop.f32.mrf.mxu0
  %870 = vmatprep.mubr.f32.mxu0 0.0
  %871 = vmatmul.mubr.f32.gmra.mxu0 %v687
  %v872 = vpop.f32.mrf.mxu0
  %v873 = vadd.f32 %v724, %v872
  %v874 = vpop.f32.mrf.mxu0
  %875 = vmatprep.mubr.f32.mxu0 0.0
  %876 = vmatmul.mubr.f32.gmra.mxu0 %v688
  %v877 = vpop.f32.mrf.mxu0
  %v878 = vadd.f32 %v724, %v877
  %v879 = vpop.f32.mrf.mxu0
  %880 = vmatprep.mubr.f32.mxu0 0.0
  %881 = vmatmul.mubr.f32.gmra.mxu0 %v689
  %v882 = vpop.f32.mrf.mxu0
  %v883 = vadd.f32 %v724, %v882
  %v884 = vpop.f32.mrf.mxu0
  %885 = vmatprep.mubr.f32.mxu0 0.0
  %886 = vmatmul.mubr.f32.gmra.mxu0 %v690
  %v887 = vpop.f32.mrf.mxu0
  %v888 = vadd.f32 %v724, %v887
  %v889 = vpop.f32.mrf.mxu0
  %890 = vmatprep.mubr.f32.mxu0 0.0
  %891 = vmatmul.mubr.f32.gmra.mxu0 %v691
  %v892 = vpop.f32.mrf.mxu0
  %v893 = vadd.f32 %v724, %v892
  %v894 = vpop.f32.mrf.mxu0
  %895 = vmatprep.mubr.f32.mxu0 0.0
  %896 = vmatmul.mubr.f32.gmra.mxu0 %v692
  %v897 = vpop.f32.mrf.mxu0
  %v898 = vadd.f32 %v724, %v897
  %v899 = vpop.f32.mrf.mxu0
  %900 = vmatprep.mubr.f32.mxu0 0.0
  %901 = vmatmul.mubr.f32.gmra.mxu0 %v693
  %v902 = vpop.f32.mrf.mxu0
  %v903 = vadd.f32 %v724, %v902
  %v904 = vpop.f32.mrf.mxu0
  %905 = vmatprep.mubr.f32.mxu0 0.0
  %906 = vmatmul.mubr.f32.gmra.mxu0 %v694
  %v907 = vpop.f32.mrf.mxu0
  %v908 = vadd.f32 %v724, %v907
  %v909 = vpop.f32.mrf.mxu0
  %910 = vmatprep.mubr.f32.mxu0 0.0
  %911 = vmatmul.mubr.f32.gmra.mxu0 %v695
  %v912 = vpop.f32.mrf.mxu0
  %v913 = vadd.f32 %v724, %v912
  %v914 = vpop.f32.mrf.mxu0
  %915 = vmatprep.mubr.f32.mxu0 0.0
  %916 = vmatmul.mubr.f32.gmra.mxu0 %v696
  %v917 = vpop.f32.mrf.mxu0
  %v918 = vadd.f32 %v724, %v917
  %v919 = vpop.f32.mrf.mxu0
  %920 = vmatprep.mubr.f32.mxu0 0.0
  %921 = vmatmul.mubr.f32.gmra.mxu0 %v697
  %v922 = vpop.f32.mrf.mxu0
  %v923 = vadd.f32 %v724, %v922
  %v924 = vpop.f32.mrf.mxu0
  %925 = vmatprep.mubr.f32.mxu0 0.0
  %926 = vmatmul.mubr.f32.gmra.mxu0 %v698
  %v927 = vpop.f32.mrf.mxu0
  %v928 = vadd.f32 %v724, %v927
  %v929 = vpop.f32.mrf.mxu0
  %930 = vmatprep.mubr.f32.mxu0 0.0
  %931 = vmatmul.mubr.f32.gmra.mxu0 %v699
  %v932 = vpop.f32.mrf.mxu0
  %v933 = vadd.f32 %v724, %v932
  %v934 = vpop.f32.mrf.mxu0
  %935 = vmatprep.mubr.f32.mxu0 0.0
  %936 = vmatmul.mubr.f32.gmra.mxu0 %v700
  %v937 = vpop.f32.mrf.mxu0
  %v938 = vadd.f32 %v724, %v937
  %v939 = vpop.f32.mrf.mxu0
  %940 = vmatprep.mubr.f32.mxu0 0.0
  %941 = vmatmul.mubr.f32.gmra.mxu0 %v701
  %v942 = vpop.f32.mrf.mxu0
  %v943 = vadd.f32 %v724, %v942
  %v944 = vpop.f32.mrf.mxu0
  %945 = vmatprep.mubr.f32.mxu0 0.0
  %946 = vmatmul.mubr.f32.gmra.mxu0 %v702
  %v947 = vpop.f32.mrf.mxu0
  %v948 = vadd.f32 %v724, %v947
  %v949 = vpop.f32.mrf.mxu0
  %950 = vdwg.mxu0
  %v951 = verf.f32.pop %v793
  %v952 = verf.f32.pop %v798
  %v953 = verf.f32.pop %v803
  %v954 = verf.f32.pop %v808
  %v955 = verf.f32.pop %v813
  %v956 = verf.f32.pop %v818
  %v957 = verf.f32.pop %v823
  %v958 = verf.f32.pop %v828
  %v959 = verf.f32.pop %v833
  %v960 = verf.f32.pop %v838
  %v961 = verf.f32.pop %v843
  %v962 = verf.f32.pop %v848
  %v963 = verf.f32.pop %v853
  %v964 = verf.f32.pop %v858
  %v965 = verf.f32.pop %v863
  %v966 = verf.f32.pop %v868
  %v967 = verf.f32.pop %v873
  %v968 = verf.f32.pop %v878
  %v969 = verf.f32.pop %v883
  %v970 = verf.f32.pop %v888
  %v971 = verf.f32.pop %v893
  %v972 = verf.f32.pop %v898
  %v973 = verf.f32.pop %v903
  %v974 = verf.f32.pop %v908
  %v975 = verf.f32.pop %v913
  %v976 = verf.f32.pop %v918
  %v977 = verf.f32.pop %v923
  %v978 = verf.f32.pop %v928
  %v979 = verf.f32.pop %v933
  %v980 = verf.f32.pop %v938
  %v981 = verf.f32.pop %v943
  %v982 = verf.f32.pop %v948
  %v983 = vadd.f32 %v951, 1.0
  %v984 = vadd.f32 %v952, 1.0
  %v985 = vadd.f32 %v953, 1.0
  %v986 = vadd.f32 %v954, 1.0
  %v987 = vadd.f32 %v955, 1.0
  %v988 = vadd.f32 %v956, 1.0
  %v989 = vadd.f32 %v957, 1.0
  %v990 = vadd.f32 %v958, 1.0
  %v991 = vadd.f32 %v959, 1.0
  %v992 = vadd.f32 %v960, 1.0
  %v993 = vadd.f32 %v961, 1.0
  %v994 = vadd.f32 %v962, 1.0
  %v995 = vadd.f32 %v963, 1.0
  %v996 = vadd.f32 %v964, 1.0
  %v997 = vadd.f32 %v965, 1.0
  %v998 = vadd.f32 %v966, 1.0
  %v999 = vadd.f32 %v967, 1.0
  %v1000 = vadd.f32 %v968, 1.0
  %v1001 = vadd.f32 %v969, 1.0
  %v1002 = vadd.f32 %v970, 1.0
  %v1003 = vadd.f32 %v971, 1.0
  %v1004 = vadd.f32 %v972, 1.0
  %v1005 = vadd.f32 %v973, 1.0
  %v1006 = vadd.f32 %v974, 1.0
  %v1007 = vadd.f32 %v975, 1.0
  %v1008 = vadd.f32 %v976, 1.0
  %v1009 = vadd.f32 %v977, 1.0
  %v1010 = vadd.f32 %v978, 1.0
  %v1011 = vadd.f32 %v979, 1.0
  %v1012 = vadd.f32 %v980, 1.0
  %v1013 = vadd.f32 %v981, 1.0
  %v1014 = vadd.f32 %v982, 1.0
  %v1015 = vmul.f32 %v983, 0.5
  %v1016 = vmul.f32 %v984, 0.5
  %v1017 = vmul.f32 %v985, 0.5
  %v1018 = vmul.f32 %v986, 0.5
  %v1019 = vmul.f32 %v987, 0.5
  %v1020 = vmul.f32 %v988, 0.5
  %v1021 = vmul.f32 %v989, 0.5
  %v1022 = vmul.f32 %v990, 0.5
  %v1023 = vmul.f32 %v991, 0.5
  %v1024 = vmul.f32 %v992, 0.5
  %v1025 = vmul.f32 %v993, 0.5
  %v1026 = vmul.f32 %v994, 0.5
  %v1027 = vmul.f32 %v995, 0.5
  %v1028 = vmul.f32 %v996, 0.5
  %v1029 = vmul.f32 %v997, 0.5
  %v1030 = vmul.f32 %v998, 0.5
  %v1031 = vmul.f32 %v999, 0.5
  %v1032 = vmul.f32 %v1000, 0.5
  %v1033 = vmul.f32 %v1001, 0.5
  %v1034 = vmul.f32 %v1002, 0.5
  %v1035 = vmul.f32 %v1003, 0.5
  %v1036 = vmul.f32 %v1004, 0.5
  %v1037 = vmul.f32 %v1005, 0.5
  %v1038 = vmul.f32 %v1006, 0.5
  %v1039 = vmul.f32 %v1007, 0.5
  %v1040 = vmul.f32 %v1008, 0.5
  %v1041 = vmul.f32 %v1009, 0.5
  %v1042 = vmul.f32 %v1010, 0.5
  %v1043 = vmul.f32 %v1011, 0.5
  %v1044 = vmul.f32 %v1012, 0.5
  %v1045 = vmul.f32 %v1013, 0.5
  %v1046 = vmul.f32 %v1014, 0.5
  %vm1047 = vcmask 64512
  %1048 = vst.msk [vmem:[%s7] sm:$0xff] %vm1047, %v1015
  %1049 = vst.msk [vmem:[%s7 + $0x8] sm:$0xff] %vm1047, %v1016
  %1050 = vst.msk [vmem:[%s7 + $0x10] sm:$0xff] %vm1047, %v1017
  %1051 = vst.msk [vmem:[%s7 + $0x18] sm:$0xff] %vm1047, %v1018
  %1052 = vst.msk [vmem:[%s7 + $0x20] sm:$0xff] %vm1047, %v1019
  %1053 = vst.msk [vmem:[%s7 + $0x28] sm:$0xff] %vm1047, %v1020
  %1054 = vst.msk [vmem:[%s7 + $0x30] sm:$0xff] %vm1047, %v1021
  %1055 = vst.msk [vmem:[%s7 + $0x38] sm:$0xff] %vm1047, %v1022
  %1056 = vst.msk [vmem:[%s7 + $0x40] sm:$0xff] %vm1047, %v1023
  %1057 = vst.msk [vmem:[%s7 + $0x48] sm:$0xff] %vm1047, %v1024
  %1058 = vst.msk [vmem:[%s7 + $0x50] sm:$0xff] %vm1047, %v1025
  %1059 = vst.msk [vmem:[%s7 + $0x58] sm:$0xff] %vm1047, %v1026
  %1060 = vst.msk [vmem:[%s7 + $0x60] sm:$0xff] %vm1047, %v1027
  %1061 = vst.msk [vmem:[%s7 + $0x68] sm:$0xff] %vm1047, %v1028
  %1062 = vst.msk [vmem:[%s7 + $0x70] sm:$0xff] %vm1047, %v1029
  %1063 = vst.msk [vmem:[%s7 + $0x78] sm:$0xff] %vm1047, %v1030
  %1064 = vst.msk [vmem:[%s7 + $0x80] sm:$0xff] %vm1047, %v1031
  %1065 = vst.msk [vmem:[%s7 + $0x88] sm:$0xff] %vm1047, %v1032
  %1066 = vst.msk [vmem:[%s7 + $0x90] sm:$0xff] %vm1047, %v1033
  %1067 = vst.msk [vmem:[%s7 + $0x98] sm:$0xff] %vm1047, %v1034
  %1068 = vst.msk [vmem:[%s7 + $0xa0] sm:$0xff] %vm1047, %v1035
  %1069 = vst.msk [vmem:[%s7 + $0xa8] sm:$0xff] %vm1047, %v1036
  %1070 = vst.msk [vmem:[%s7 + $0xb0] sm:$0xff] %vm1047, %v1037
  %1071 = vst.msk [vmem:[%s7 + $0xb8] sm:$0xff] %vm1047, %v1038
  %1072 = vst.msk [vmem:[%s7 + $0xc0] sm:$0xff] %vm1047, %v1039
  %1073 = vst.msk [vmem:[%s7 + $0xc8] sm:$0xff] %vm1047, %v1040
  %1074 = vst.msk [vmem:[%s7 + $0xd0] sm:$0xff] %vm1047, %v1041
  %1075 = vst.msk [vmem:[%s7 + $0xd8] sm:$0xff] %vm1047, %v1042
  %1076 = vst.msk [vmem:[%s7 + $0xe0] sm:$0xff] %vm1047, %v1043
  %1077 = vst.msk [vmem:[%s7 + $0xe8] sm:$0xff] %vm1047, %v1044
  %1078 = vst.msk [vmem:[%s7 + $0xf0] sm:$0xff] %vm1047, %v1045
  %1079 = vst.msk [vmem:[%s7 + $0xf8] sm:$0xff] %vm1047, %v1046
  // Predicated region
  $region30: #{_forward_impl.1} parent=0 // pred_check
    _
  $region31: #{_forward_impl.1} parent=0 // pred_check_branch
    %1081 = sbr.rel (0) target = $region33
  $region32: #{_forward_impl.1} parent=0 // pred_region
    _
  $region33: #{_forward_impl.1} parent=0 // pred_fallthru
    _
  // Predicated region
  $region34: #{_forward_impl.1} parent=0 // pred_check
    _
  $region35: #{_forward_impl.1} parent=0 // pred_check_branch
    %1083 = sbr.rel (0) target = $region37
  $region36: #{_forward_impl.1} parent=0 // pred_region
    _
  $region37: #{_forward_impl.1} parent=0 // pred_fallthru
    _

</llo_original>
